<compile_context>
chip_gen: v7x
topology: tpu7x:2x2x1
jax: 0.10.0
libtpu: 0.0.40
codegen_flags: <defaults>
</compile_context>

<pallas_src>
import functools

import jax
import jax.numpy as jnp
from jax import lax
from jax.experimental import pallas as pl
from jax.experimental.pallas import tpu as pltpu


# ----------------------------------------------------------------------------
# Kernels
# ----------------------------------------------------------------------------
def _main_kernel(x_ref, att_ref, wg_ref, w1h_ref, w2_ref,
                 pre_ref, psum_ref, pssq_ref, *, b_blk, compute_dtype):
    """Hot path for a block of batch elements, channels-first (C, N) layout.

    x_ref   : (b_blk, Cin, N)  input, flattened spatially
    att_ref : (b_blk, N, N)    RAW att (f32, untransposed)
    wg_ref  : (Cp, Cin)        g conv weight
    w1h_ref : (Cin, Cp)        fused  w1 + w2 @ wh
    w2_ref  : (Cin, Cp)        w2 conv weight
    pre_ref : (b_blk, Cin, N)  pre-BN output (bf16 on the perf path)
    psum_ref/pssq_ref : (b_blk, Cin, 1) per-element channel sums / sum-squares
    """
    # Transposed-B contraction: contract lhs dim 1 with rhs dim 1 (i.e. X @ A^T)
    dn_t = (((1,), (1,)), ((), ()))

    wg = wg_ref[...]
    w1h = w1h_ref[...]
    w2 = w2_ref[...]

    for bi in range(b_blk):                                   # static unroll
        X = x_ref[bi]                                         # (Cin, N) f32
        A = att_ref[bi].astype(compute_dtype)                 # cast in VMEM/vregs

        # g = conv1x1_g(x) channels-first: G = Wg @ X
        G = jnp.dot(wg, X, preferred_element_type=jnp.float32)        # (Cp, N)

        # L2 @ g == g - 2*(A@g) + A@(A@g); channels-first with raw A:
        #   T = G @ A^T , U = T @ A^T , x2att = G - 2T + U
        Gc = G.astype(compute_dtype)
        T = lax.dot_general(Gc, A, dn_t, preferred_element_type=jnp.float32)
        U = lax.dot_general(T.astype(compute_dtype), A, dn_t,
                            preferred_element_type=jnp.float32)
        x2att = G - 2.0 * T + U                                        # (Cp, N)

        # pre = w1@G + w2@(wh@G + x2att) == (w1 + w2@wh)@G + w2@x2att
        pre = (jnp.dot(w1h, G, preferred_element_type=jnp.float32)
               + jnp.dot(w2, x2att, preferred_element_type=jnp.float32))

        pre_ref[bi] = pre.astype(pre_ref.dtype)                        # (Cin, N)

        # BN batch-statistic partials, reduced in f32 BEFORE any downcast.
        psum_ref[bi] = jnp.sum(pre, axis=1, keepdims=True)             # (Cin, 1)
        pssq_ref[bi] = jnp.sum(pre * pre, axis=1, keepdims=True)       # (Cin, 1)


def _bn_relu_add_kernel(pre_ref, x_ref, scale_ref, shift_ref, out_ref, *, b_blk):
    """Elementwise epilogue: BN affine (precomputed scale/shift), ReLU, residual."""
    scale = scale_ref[...]                                             # (Cin, 1)
    shift = shift_ref[...]                                             # (Cin, 1)
    for bi in range(b_blk):                                            # static unroll
        y = pre_ref[bi].astype(jnp.float32) * scale + shift            # (Cin, N)
        out_ref[bi] = (jnp.maximum(y, 0.0) + x_ref[bi]).astype(out_ref.dtype)


# ----------------------------------------------------------------------------
# Wrapper
# ----------------------------------------------------------------------------
def _vmem_capacity_bytes():
    try:
        cap = getattr(pltpu.get_tpu_info(), "vmem_capacity_bytes", None)
        if cap:
            return int(cap)
    except Exception:
        pass
    return 64 * 1024 * 1024          # conservative fallback (v7x physical VMEM)


def _pick_batch_block(b, n):
    """Block several batch elements per grid step when N is small."""
    att_bytes = 4 * n * n                          # raw f32 att per element
    target = 4 * 1024 * 1024                       # ~4 MiB of att per step
    bb = max(1, min(b, target // max(att_bytes, 1)))
    if b >= 2:                                     # keep >=2 grid steps (2 TCs)
        bb = min(bb, b // 2)
    bb = max(bb, 1)
    while b % bb:                                  # avoid ragged last block
        bb -= 1
    return bb


def cayley_snl_forward(x_nchw, att, params, *,
                       att_compute_dtype=jnp.bfloat16, pre_dtype=None):
    b, cin, h, w = x_nchw.shape
    N = h * w
    cp = params["wg"].shape[0]                     # planes

    if pre_dtype is None:
        pre_dtype = (jnp.float32 if att_compute_dtype == jnp.float32
                     else jnp.bfloat16)
    pre_bytes = jnp.dtype(pre_dtype).itemsize

    # Channels-first flattened view — no transpose needed.
    x_cf = x_nchw.reshape(b, cin, N)               # (b, Cin, N)

    wg = params["wg"]                              # (Cp, Cin)
    w2 = params["w2"]                              # (Cin, Cp)
    w1h = params["w1"] + jnp.dot(w2, params["wh"])  # (Cin, Cp)  fused w1 + w2@wh

    b_blk = _pick_batch_block(b, N)
    n_steps = b // b_blk

    # --- VMEM plan for the first pallas_call ---------------------------------
    budget = int(_vmem_capacity_bytes() * 0.8)     # headroom for compiler internals
    x_blk = b_blk * cin * N * 4
    pre_blk = b_blk * cin * N * pre_bytes
    stat_blk = b_blk * cin * 4
    w_bytes = (cp * cin + 2 * cin * cp) * 4
    temps = 8 * cp * N * 4                         # f32 G/T/U/x2att (+ casts)
    att_blk = b_blk * N * N * 4                    # raw f32 att block
    fixed = 2 * x_blk + 2 * pre_blk + 4 * stat_blk * 2 + 2 * w_bytes + temps
    if fixed + 2 * att_blk <= budget:
        att_buffers = 2                            # fully overlapped att DMA
    else:
        # Single-buffer att rather than blow v7x's 64 MiB (step is DMA-bound
        # anyway).  TODO(synk): row-tile the att contraction for N where even
        # a single buffer does not fit.
        att_buffers = 1
    vmem_limit = int(min(budget,
                         max(2 * (fixed + att_buffers * att_blk),
                             32 * 1024 * 1024)))

    if att_buffers == 2:
        att_spec = pl.BlockSpec((b_blk, N, N), lambda i: (i, 0, 0))
    else:
        att_spec = pl.BlockSpec((b_blk, N, N), lambda i: (i, 0, 0),
                                pipeline_mode=pl.Buffered(1))

    # Advisory cost: flop-cheap, HBM-heavy (streams att once in f32).
    flops = b * (2 * cp * cin * N + 4 * cp * N * N + 4 * cin * cp * N)
    bytes_accessed = (b * N * N * 4 + b * cin * N * 4 + b * cin * N * pre_bytes
                      + 2 * b * cin * 4 + w_bytes)
    cost = pl.CostEstimate(flops=flops, transcendentals=0,
                           bytes_accessed=bytes_accessed)

    main = functools.partial(_main_kernel, b_blk=b_blk,
                             compute_dtype=att_compute_dtype)

    pre, psum, pssq = pl.pallas_call(
        main,
        out_shape=(
            jax.ShapeDtypeStruct((b, cin, N), pre_dtype),
            jax.ShapeDtypeStruct((b, cin, 1), jnp.float32),
            jax.ShapeDtypeStruct((b, cin, 1), jnp.float32),
        ),
        grid_spec=pltpu.PrefetchScalarGridSpec(
            num_scalar_prefetch=0,
            grid=(n_steps,),
            in_specs=[
                pl.BlockSpec((b_blk, cin, N), lambda i: (i, 0, 0)),
                att_spec,
                pl.BlockSpec((cp, cin), lambda i: (0, 0)),
                pl.BlockSpec((cin, cp), lambda i: (0, 0)),
                pl.BlockSpec((cin, cp), lambda i: (0, 0)),
            ],
            out_specs=(
                pl.BlockSpec((b_blk, cin, N), lambda i: (i, 0, 0)),
                pl.BlockSpec((b_blk, cin, 1), lambda i: (i, 0, 0)),
                pl.BlockSpec((b_blk, cin, 1), lambda i: (i, 0, 0)),
            ),
        ),
        cost_estimate=cost,
        compiler_params=pltpu.CompilerParams(
            # No resident accumulators -> batch axis is safely parallel
            # (megacore / 2-TC sharding on v7x).
            dimension_semantics=("parallel",),
            vmem_limit_bytes=vmem_limit,
        ),
    )(x_cf, att, wg, w1h, w2)

    # BatchNorm2d (training mode): batch mean / biased variance per channel.
    # Tiny cross-batch reduce + scale/shift prep stays in plain XLA (f32 stats).
    count = jnp.float32(b * N)
    mean = jnp.sum(psum, axis=0) / count                         # (Cin, 1)
    var = jnp.sum(pssq, axis=0) / count - mean * mean            # biased variance
    eps = 1e-5
    scale = params["gamma"][:, None] * lax.rsqrt(var + eps)      # (Cin, 1)
    shift = params["beta"][:, None] - mean * scale               # (Cin, 1)

    epi = functools.partial(_bn_relu_add_kernel, b_blk=b_blk)
    out_cf = pl.pallas_call(
        epi,
        out_shape=jax.ShapeDtypeStruct((b, cin, N), jnp.float32),
        grid_spec=pltpu.PrefetchScalarGridSpec(
            num_scalar_prefetch=0,
            grid=(n_steps,),
            in_specs=[
                pl.BlockSpec((b_blk, cin, N), lambda i: (i, 0, 0)),
                pl.BlockSpec((b_blk, cin, N), lambda i: (i, 0, 0)),
                pl.BlockSpec((cin, 1), lambda i: (0, 0)),
                pl.BlockSpec((cin, 1), lambda i: (0, 0)),
            ],
            out_specs=pl.BlockSpec((b_blk, cin, N), lambda i: (i, 0, 0)),
        ),
        compiler_params=pltpu.CompilerParams(
            dimension_semantics=("parallel",)),
    )(pre, x_cf, scale, shift)

    return out_cf.reshape(b, cin, h, w)


# ----------------------------------------------------------------------------
# Pure-JAX reference (mirrors the PyTorch forward, original L@L formulation)
# ----------------------------------------------------------------------------
def reference(x_nchw, att, params):
    b, cin, h, w = x_nchw.shape
    N = h * w

    def conv1x1(x, W):                                  # x (b,ci,h,w), W (co,ci)
        return jnp.einsum("oi,bihw->bohw", W, x)

    g = conv1x1(x_nchw, params["wg"])                   # (b, cp, h, w)
    G = g.reshape(b, -1, N).transpose(0, 2, 1)          # (b, N, cp)
    x_w = conv1x1(g, params["wh"])
    x_1 = conv1x1(g, params["w1"])
    I = jnp.eye(N, dtype=att.dtype)[None]
    L = I - att
    L2 = jnp.einsum("bij,bjk->bik", L, L)
    x_2 = jnp.einsum("bij,bjc->bic", L2, G)
    x_2 = x_w.reshape(b, -1, N).transpose(0, 2, 1) + x_2
    x_2img = x_2.transpose(0, 2, 1).reshape(b, -1, h, w)
    out = x_1 + conv1x1(x_2img, params["w2"])
    mean = out.mean(axis=(0, 2, 3), keepdims=True)
    var = ((out - mean) ** 2).mean(axis=(0, 2, 3), keepdims=True)
    out = (out - mean) / jnp.sqrt(var + 1e-5)
    out = out * params["gamma"][None, :, None, None] + params["beta"][None, :, None, None]
    out = jax.nn.relu(out)
    return out + x_nchw


if __name__ == "__main__":
    b, inplanes, planes, h, w = 2, 8, 16, 8, 8
    N = h * w

    key = jax.random.PRNGKey(0)
    k1, k2, k3, k4, k5, k6 = jax.random.split(key, 6)
    x = jax.random.normal(k1, (b, inplanes, h, w), jnp.float32)
    att = 0.1 * jax.random.normal(k2, (b, N, N), jnp.float32)

    # Deterministic synthetic parameters (conv weights are (Cout, Cin), k=1).
    params = {
        "wg": 0.1 * jax.random.normal(k3, (planes, inplanes), jnp.float32),
        "wh": 0.1 * jax.random.normal(k4, (planes, planes), jnp.float32),
        "w1": 0.1 * jax.random.normal(k5, (inplanes, planes), jnp.float32),
        "w2": 0.1 * jax.random.normal(k6, (inplanes, planes), jnp.float32),
        "gamma": jnp.ones((inplanes,), jnp.float32),   # BN weight init
        "beta": jnp.zeros((inplanes,), jnp.float32),   # BN bias init
    }

    ref = jax.block_until_ready(reference(x, att, params))

    # Strict numerics: f32 contractions and f32 pre buffer.
    fwd_f32 = jax.jit(functools.partial(cayley_snl_forward,
                                        att_compute_dtype=jnp.float32))
    out_f32 = jax.block_until_ready(fwd_f32(x, att, params))
    assert out_f32.shape == x.shape and out_f32.dtype == x.dtype
    err_f32 = float(jnp.max(jnp.abs(out_f32 - ref)))
    assert jnp.allclose(out_f32, ref, atol=2e-3, rtol=2e-3), err_f32

    # Default (performance) path: bf16 MXU contractions (att cast in VMEM,
    # f32 accumulation) and bf16 pre writeback.  Deliberate accuracy
    # relaxation — BN's 1/std rescale amplifies the bf16 rounding.
    fwd_bf16 = jax.jit(functools.partial(cayley_snl_forward,
                                         att_compute_dtype=jnp.bfloat16))
    out_bf16 = jax.block_until_ready(fwd_bf16(x, att, params))
    assert out_bf16.shape == x.shape and out_bf16.dtype == x.dtype
    err_bf16 = float(jnp.max(jnp.abs(out_bf16 - ref)))
    assert jnp.allclose(out_bf16, ref, atol=3e-2, rtol=3e-2), err_bf16

    print("KERNEL_OK")
</pallas_src>

<mosaic_0001>
module attributes {stable_mosaic.version = 11 : i64} {
  func.func @_main_kernel(%arg0: i32, %arg1: memref<1x8x64xf32, #tpu.memory_space<vmem>>, %arg2: memref<1x64x64xf32, #tpu.memory_space<vmem>>, %arg3: memref<16x8xf32, #tpu.memory_space<vmem>>, %arg4: memref<8x16xf32, #tpu.memory_space<vmem>>, %arg5: memref<8x16xf32, #tpu.memory_space<vmem>>, %arg6: memref<1x8x64xf32, #tpu.memory_space<vmem>>, %arg7: memref<1x8x1xf32, #tpu.memory_space<vmem>>, %arg8: memref<1x8x1xf32, #tpu.memory_space<vmem>>) attributes {dimension_semantics = [#tpu.dimension_semantics<parallel>], iteration_bounds = array<i64: 2>, scalar_prefetch = 0 : i64, scratch_operands = 0 : i64, tpu.core_type = #tpu.core_type<tc>, window_params = [{transform_indices = @transform_0, window_bounds = array<i64: 1, 8, 64>}, {transform_indices = @transform_1, window_bounds = array<i64: 1, 64, 64>}, {pipeline_mode = #tpu.pipeline_mode<synchronous>, transform_indices = @transform_2, window_bounds = array<i64: 16, 8>}, {pipeline_mode = #tpu.pipeline_mode<synchronous>, transform_indices = @transform_3, window_bounds = array<i64: 8, 16>}, {pipeline_mode = #tpu.pipeline_mode<synchronous>, transform_indices = @transform_4, window_bounds = array<i64: 8, 16>}, {transform_indices = @transform_5, window_bounds = array<i64: 1, 8, 64>}, {transform_indices = @transform_6, window_bounds = array<i64: 1, 8, 1>}, {transform_indices = @transform_7, window_bounds = array<i64: 1, 8, 1>}]} {
    %c0 = arith.constant 0 : index
    %c0_0 = arith.constant 0 : index
    %0 = vector.load %arg3[%c0, %c0_0] : memref<16x8xf32, #tpu.memory_space<vmem>>, vector<16x8xf32>
    %c0_1 = arith.constant 0 : index
    %c0_2 = arith.constant 0 : index
    %1 = vector.load %arg4[%c0_1, %c0_2] : memref<8x16xf32, #tpu.memory_space<vmem>>, vector<8x16xf32>
    %c0_3 = arith.constant 0 : index
    %c0_4 = arith.constant 0 : index
    %2 = vector.load %arg5[%c0_3, %c0_4] : memref<8x16xf32, #tpu.memory_space<vmem>>, vector<8x16xf32>
    %c0_5 = arith.constant 0 : index
    %c0_6 = arith.constant 0 : index
    %c0_7 = arith.constant 0 : index
    %3 = vector.load %arg1[%c0_5, %c0_6, %c0_7] : memref<1x8x64xf32, #tpu.memory_space<vmem>>, vector<1x8x64xf32>
    %4 = vector.shape_cast %3 : vector<1x8x64xf32> to vector<8x64xf32>
    %c0_8 = arith.constant 0 : index
    %c0_9 = arith.constant 0 : index
    %c0_10 = arith.constant 0 : index
    %5 = vector.load %arg2[%c0_8, %c0_9, %c0_10] : memref<1x64x64xf32, #tpu.memory_space<vmem>>, vector<1x64x64xf32>
    %6 = vector.shape_cast %5 : vector<1x64x64xf32> to vector<64x64xf32>
    %cst = arith.constant dense<0.000000e+00> : vector<16x64xf32>
    %7 = tpu.matmul %0, %4, %cst {dimension_numbers = #tpu.dot_dimension_numbers<[1], [0], [0], [1], [0, 0, 1, 1], [], []>} : vector<16x8xf32>, vector<8x64xf32>, vector<16x64xf32> -> vector<16x64xf32>
    %cst_11 = arith.constant dense<0.000000e+00> : vector<16x64xf32>
    %8 = tpu.matmul %7, %6, %cst_11 {dimension_numbers = #tpu.dot_dimension_numbers<[1], [1], [0], [0], [0, 0, 1, 0], [], []>} : vector<16x64xf32>, vector<64x64xf32>, vector<16x64xf32> -> vector<16x64xf32>
    %cst_12 = arith.constant dense<0.000000e+00> : vector<16x64xf32>
    %9 = tpu.matmul %8, %6, %cst_12 {dimension_numbers = #tpu.dot_dimension_numbers<[1], [1], [0], [0], [0, 0, 1, 0], [], []>} : vector<16x64xf32>, vector<64x64xf32>, vector<16x64xf32> -> vector<16x64xf32>
    %cst_13 = arith.constant 2.000000e+00 : f32
    %10 = vector.broadcast %cst_13 : f32 to vector<16x64xf32>
    %11 = arith.mulf %10, %8 : vector<16x64xf32>
    %12 = arith.subf %7, %11 : vector<16x64xf32>
    %13 = arith.addf %12, %9 : vector<16x64xf32>
    %cst_14 = arith.constant dense<0.000000e+00> : vector<8x64xf32>
    %14 = tpu.matmul %1, %7, %cst_14 {dimension_numbers = #tpu.dot_dimension_numbers<[1], [0], [0], [1], [0, 0, 1, 1], [], []>} : vector<8x16xf32>, vector<16x64xf32>, vector<8x64xf32> -> vector<8x64xf32>
    %cst_15 = arith.constant dense<0.000000e+00> : vector<8x64xf32>
    %15 = tpu.matmul %2, %13, %cst_15 {dimension_numbers = #tpu.dot_dimension_numbers<[1], [0], [0], [1], [0, 0, 1, 1], [], []>} : vector<8x16xf32>, vector<16x64xf32>, vector<8x64xf32> -> vector<8x64xf32>
    %16 = arith.addf %14, %15 : vector<8x64xf32>
    %c0_16 = arith.constant 0 : index
    %c0_17 = arith.constant 0 : index
    %c0_18 = arith.constant 0 : index
    %17 = vector.load %arg6[%c0_16, %c0_17, %c0_18] : memref<1x8x64xf32, #tpu.memory_space<vmem>>, vector<1x8x64xf32>
    %18 = vector.shape_cast %17 : vector<1x8x64xf32> to vector<8x64xf32>
    %19 = vector.shape_cast %16 : vector<8x64xf32> to vector<1x8x64xf32>
    tpu.vector_store %arg6[%c0_16, %c0_17, %c0_18], %19 {strides = array<i32>} : memref<1x8x64xf32, #tpu.memory_space<vmem>>, vector<1x8x64xf32>,
    %cst_19 = arith.constant dense<0.000000e+00> : vector<8xf32>
    %20 = vector.multi_reduction <add>, %16, %cst_19 [1] : vector<8x64xf32> to vector<8xf32>
    %21 = vector.shape_cast %20 : vector<8xf32> to vector<8x1xf32>
    %c0_20 = arith.constant 0 : index
    %c0_21 = arith.constant 0 : index
    %c0_22 = arith.constant 0 : index
    %22 = vector.load %arg7[%c0_20, %c0_21, %c0_22] : memref<1x8x1xf32, #tpu.memory_space<vmem>>, vector<1x8x1xf32>
    %23 = vector.shape_cast %22 : vector<1x8x1xf32> to vector<8x1xf32>
    %24 = vector.shape_cast %21 : vector<8x1xf32> to vector<1x8x1xf32>
    tpu.vector_store %arg7[%c0_20, %c0_21, %c0_22], %24 {strides = array<i32>} : memref<1x8x1xf32, #tpu.memory_space<vmem>>, vector<1x8x1xf32>,
    %25 = arith.mulf %16, %16 : vector<8x64xf32>
    %cst_23 = arith.constant dense<0.000000e+00> : vector<8xf32>
    %26 = vector.multi_reduction <add>, %25, %cst_23 [1] : vector<8x64xf32> to vector<8xf32>
    %27 = vector.shape_cast %26 : vector<8xf32> to vector<8x1xf32>
    %c0_24 = arith.constant 0 : index
    %c0_25 = arith.constant 0 : index
    %c0_26 = arith.constant 0 : index
    %28 = vector.load %arg8[%c0_24, %c0_25, %c0_26] : memref<1x8x1xf32, #tpu.memory_space<vmem>>, vector<1x8x1xf32>
    %29 = vector.shape_cast %28 : vector<1x8x1xf32> to vector<8x1xf32>
    %30 = vector.shape_cast %27 : vector<8x1xf32> to vector<1x8x1xf32>
    tpu.vector_store %arg8[%c0_24, %c0_25, %c0_26], %30 {strides = array<i32>} : memref<1x8x1xf32, #tpu.memory_space<vmem>>, vector<1x8x1xf32>,
    return
  }
  func.func @transform_0(%arg0: i32) -> (i32, i32, i32) {
    %c0_i32 = arith.constant 0 : i32
    %c0_i32_0 = arith.constant 0 : i32
    %c0_i32_1 = arith.constant 0 : i32
    return %arg0, %c0_i32, %c0_i32_0 : i32, i32, i32
  }
  func.func @transform_1(%arg0: i32) -> (i32, i32, i32) {
    %c0_i32 = arith.constant 0 : i32
    %c0_i32_0 = arith.constant 0 : i32
    %c0_i32_1 = arith.constant 0 : i32
    return %arg0, %c0_i32, %c0_i32_0 : i32, i32, i32
  }
  func.func @transform_2(%arg0: i32) -> (i32, i32) {
    %c0_i32 = arith.constant 0 : i32
    %c0_i32_0 = arith.constant 0 : i32
    %c0_i32_1 = arith.constant 0 : i32
    return %c0_i32, %c0_i32_0 : i32, i32
  }
  func.func @transform_3(%arg0: i32) -> (i32, i32) {
    %c0_i32 = arith.constant 0 : i32
    %c0_i32_0 = arith.constant 0 : i32
    %c0_i32_1 = arith.constant 0 : i32
    return %c0_i32, %c0_i32_0 : i32, i32
  }
  func.func @transform_4(%arg0: i32) -> (i32, i32) {
    %c0_i32 = arith.constant 0 : i32
    %c0_i32_0 = arith.constant 0 : i32
    %c0_i32_1 = arith.constant 0 : i32
    return %c0_i32, %c0_i32_0 : i32, i32
  }
  func.func @transform_5(%arg0: i32) -> (i32, i32, i32) {
    %c0_i32 = arith.constant 0 : i32
    %c0_i32_0 = arith.constant 0 : i32
    %c0_i32_1 = arith.constant 0 : i32
    return %arg0, %c0_i32, %c0_i32_0 : i32, i32, i32
  }
  func.func @transform_6(%arg0: i32) -> (i32, i32, i32) {
    %c0_i32 = arith.constant 0 : i32
    %c0_i32_0 = arith.constant 0 : i32
    %c0_i32_1 = arith.constant 0 : i32
    return %arg0, %c0_i32, %c0_i32_0 : i32, i32, i32
  }
  func.func @transform_7(%arg0: i32) -> (i32, i32, i32) {
    %c0_i32 = arith.constant 0 : i32
    %c0_i32_0 = arith.constant 0 : i32
    %c0_i32_1 = arith.constant 0 : i32
    return %arg0, %c0_i32, %c0_i32_0 : i32, i32, i32
  }
}

module attributes {stable_mosaic.version = 11 : i64} {
  func.func @_bn_relu_add_kernel(%arg0: i32, %arg1: memref<1x8x64xf32, #tpu.memory_space<vmem>>, %arg2: memref<1x8x64xf32, #tpu.memory_space<vmem>>, %arg3: memref<8x1xf32, #tpu.memory_space<vmem>>, %arg4: memref<8x1xf32, #tpu.memory_space<vmem>>, %arg5: memref<1x8x64xf32, #tpu.memory_space<vmem>>) attributes {dimension_semantics = [#tpu.dimension_semantics<parallel>], iteration_bounds = array<i64: 2>, scalar_prefetch = 0 : i64, scratch_operands = 0 : i64, tpu.core_type = #tpu.core_type<tc>, window_params = [{transform_indices = @transform_0, window_bounds = array<i64: 1, 8, 64>}, {transform_indices = @transform_1, window_bounds = array<i64: 1, 8, 64>}, {pipeline_mode = #tpu.pipeline_mode<synchronous>, transform_indices = @transform_2, window_bounds = array<i64: 8, 1>}, {pipeline_mode = #tpu.pipeline_mode<synchronous>, transform_indices = @transform_3, window_bounds = array<i64: 8, 1>}, {transform_indices = @transform_4, window_bounds = array<i64: 1, 8, 64>}]} {
    %c0 = arith.constant 0 : index
    %c0_0 = arith.constant 0 : index
    %0 = vector.load %arg3[%c0, %c0_0] : memref<8x1xf32, #tpu.memory_space<vmem>>, vector<8x1xf32>
    %c0_1 = arith.constant 0 : index
    %c0_2 = arith.constant 0 : index
    %1 = vector.load %arg4[%c0_1, %c0_2] : memref<8x1xf32, #tpu.memory_space<vmem>>, vector<8x1xf32>
    %c0_3 = arith.constant 0 : index
    %c0_4 = arith.constant 0 : index
    %c0_5 = arith.constant 0 : index
    %2 = vector.load %arg1[%c0_3, %c0_4, %c0_5] : memref<1x8x64xf32, #tpu.memory_space<vmem>>, vector<1x8x64xf32>
    %3 = vector.shape_cast %2 : vector<1x8x64xf32> to vector<8x64xf32>
    %4 = vector.broadcast %0 : vector<8x1xf32> to vector<8x64xf32>
    %5 = arith.mulf %3, %4 : vector<8x64xf32>
    %6 = vector.broadcast %1 : vector<8x1xf32> to vector<8x64xf32>
    %7 = arith.addf %5, %6 : vector<8x64xf32>
    %cst = arith.constant 0.000000e+00 : f32
    %8 = vector.broadcast %cst : f32 to vector<8x64xf32>
    %9 = arith.maximumf %7, %8 : vector<8x64xf32>
    %c0_6 = arith.constant 0 : index
    %c0_7 = arith.constant 0 : index
    %c0_8 = arith.constant 0 : index
    %10 = vector.load %arg2[%c0_6, %c0_7, %c0_8] : memref<1x8x64xf32, #tpu.memory_space<vmem>>, vector<1x8x64xf32>
    %11 = vector.shape_cast %10 : vector<1x8x64xf32> to vector<8x64xf32>
    %12 = arith.addf %9, %11 : vector<8x64xf32>
    %c0_9 = arith.constant 0 : index
    %c0_10 = arith.constant 0 : index
    %c0_11 = arith.constant 0 : index
    %13 = vector.load %arg5[%c0_9, %c0_10, %c0_11] : memref<1x8x64xf32, #tpu.memory_space<vmem>>, vector<1x8x64xf32>
    %14 = vector.shape_cast %13 : vector<1x8x64xf32> to vector<8x64xf32>
    %15 = vector.shape_cast %12 : vector<8x64xf32> to vector<1x8x64xf32>
    tpu.vector_store %arg5[%c0_9, %c0_10, %c0_11], %15 {strides = array<i32>} : memref<1x8x64xf32, #tpu.memory_space<vmem>>, vector<1x8x64xf32>,
    return
  }
  func.func @transform_0(%arg0: i32) -> (i32, i32, i32) {
    %c0_i32 = arith.constant 0 : i32
    %c0_i32_0 = arith.constant 0 : i32
    %c0_i32_1 = arith.constant 0 : i32
    return %arg0, %c0_i32, %c0_i32_0 : i32, i32, i32
  }
  func.func @transform_1(%arg0: i32) -> (i32, i32, i32) {
    %c0_i32 = arith.constant 0 : i32
    %c0_i32_0 = arith.constant 0 : i32
    %c0_i32_1 = arith.constant 0 : i32
    return %arg0, %c0_i32, %c0_i32_0 : i32, i32, i32
  }
  func.func @transform_2(%arg0: i32) -> (i32, i32) {
    %c0_i32 = arith.constant 0 : i32
    %c0_i32_0 = arith.constant 0 : i32
    %c0_i32_1 = arith.constant 0 : i32
    return %c0_i32, %c0_i32_0 : i32, i32
  }
  func.func @transform_3(%arg0: i32) -> (i32, i32) {
    %c0_i32 = arith.constant 0 : i32
    %c0_i32_0 = arith.constant 0 : i32
    %c0_i32_1 = arith.constant 0 : i32
    return %c0_i32, %c0_i32_0 : i32, i32
  }
  func.func @transform_4(%arg0: i32) -> (i32, i32, i32) {
    %c0_i32 = arith.constant 0 : i32
    %c0_i32_0 = arith.constant 0 : i32
    %c0_i32_1 = arith.constant 0 : i32
    return %arg0, %c0_i32, %c0_i32_0 : i32, i32, i32
  }
}

</mosaic_0001>

<llo_original>
// kernel: cayley_snl_forward.3
$region0: #{cayley_snl_forward.3}
  #allocation0 [shape = 'u32[]', space=smem, size = 0x4, offset = 0x4, fixed_abs, tag = 'smem constant byte address 0x4 - core index']
  #allocation1 [shape = 'u32[144,128]{1,0:T(1,128)}', space=vmem, size = 0x12000, scoped, tag = 'internal scratch']
  %s0 = inlined_call_operand.vmem [shape: f32[2,8,64], index: 0, kind: input, shape index: {}]
  %s1 = inlined_call_operand.vmem [shape: f32[2,8,64], index: 1, kind: input, shape index: {}]
  %s2 = inlined_call_operand.vmem [shape: f32[8,1], index: 2, kind: input, shape index: {}]
  %s3 = inlined_call_operand.vmem [shape: f32[8,1], index: 3, kind: input, shape index: {}]
  %s4 = inlined_call_operand.vmem [shape: f32[2,8,64], index: 4, kind: output, shape index: {}]
  %s5 = sld [smem:[#allocation0]]
  $region49: #{cayley_snl_forward.3} parent=0
    _
  %s7 = ssub.s32 1, %s5
  %s8 = scalar_select 0, %s7, %s5
  loop: start=0, step=1, limit=4
  $region2: #{cayley_snl_forward.3} parent=0 // loop_pre_header
    _
  $region3: #{cayley_snl_forward.3} parent=0 // loop_header
    %s10 = sphi 0, %s14
    %p11 = scmp.ge.s32.totalorder %s10, 4
    %s20 = sphi 0, %s22
    %s23 = sphi 0, %s20
    %s24 = sphi 0, %s23
    %s40 = sphi 0, %s24
    %s46 = sphi 0, %s48
    %s49 = sphi 0, %s46
    %s50 = sphi 0, %s49
    %s66 = sphi 0, %s50
    %s70 = sphi 0, %s70
    %s72 = sphi 0, %s70
    %s73 = sphi 0, %s72
    %s87 = sphi 0, %s73
    %s91 = sphi 0, %s91
    %s93 = sphi 0, %s91
    %s94 = sphi 0, %s93
    %s108 = sphi 0, %s94
    %s114 = sphi 0, %s116
    %s117 = sphi 0, %s114
    %s118 = sphi 0, %s117
    %s134 = sphi 0, %s118
  $region4: #{cayley_snl_forward.3} parent=0 // loop_header_branch
    %13 = sbr.rel (%p11) target = $region8
  $region5: #{cayley_snl_forward.3} parent=0 // loop_body
    %s15 = ssub.s32 %s10, 1
    %s16 = ssub.s32 %s10, 2
    %s17 = sadd.s32 %s10, 1
    %s18 = ssub.s32 %s10, %s17
    %p19 = scmp.eq.s32.totalorder %s18, 0
    %s21 = sadd.s32 %s20, 1
    %s22 = scalar_select %p19, %s20, %s21
    %p25 = pneg %p19
    %p26 = scmp.eq.s32.totalorder %s10, 1
    %p27 = por %p25, %p26
    %p28 = scmp.ne.s32.totalorder %s20, %s23
    %p29 = scmp.eq.s32.totalorder %s10, 0
    %p30 = por %p28, %p29
    %p31 = scmp.ne.s32.totalorder %s20, %s23
    %p32 = scmp.eq.s32.totalorder %s15, 1
    %p33 = por %p31, %p32
    %p34 = scmp.ne.s32.totalorder %s23, %s24
    %p35 = scmp.eq.s32.totalorder %s15, 0
    %p36 = por %p34, %p35
    %p37 = scmp.ne.s32.totalorder %s23, %s24
    %p38 = scmp.eq.s32.totalorder %s16, 1
    %p39 = por %p37, %p38
    %p41 = scmp.ne.s32.totalorder %s24, %s40
    %p42 = scmp.eq.s32.totalorder %s16, 0
    %p43 = por %p41, %p42
    %s44 = ssub.s32 %s10, %s17
    %p45 = scmp.eq.s32.totalorder %s44, 0
    %s47 = sadd.s32 %s46, 1
    %s48 = scalar_select %p45, %s46, %s47
    %p51 = pneg %p45
    %p52 = scmp.eq.s32.totalorder %s10, 1
    %p53 = por %p51, %p52
    %p54 = scmp.ne.s32.totalorder %s46, %s49
    %p55 = scmp.eq.s32.totalorder %s10, 0
    %p56 = por %p54, %p55
    %p57 = scmp.ne.s32.totalorder %s46, %s49
    %p58 = scmp.eq.s32.totalorder %s15, 1
    %p59 = por %p57, %p58
    %p60 = scmp.ne.s32.totalorder %s49, %s50
    %p61 = scmp.eq.s32.totalorder %s15, 0
    %p62 = por %p60, %p61
    %p63 = scmp.ne.s32.totalorder %s49, %s50
    %p64 = scmp.eq.s32.totalorder %s16, 1
    %p65 = por %p63, %p64
    %p67 = scmp.ne.s32.totalorder %s50, %s66
    %p68 = scmp.eq.s32.totalorder %s16, 0
    %p69 = por %p67, %p68
    %s71 = sadd.s32 %s70, 1
    %p74 = scmp.eq.s32.totalorder %s10, 1
    %p75 = scmp.ne.s32.totalorder %s70, %s72
    %p76 = scmp.eq.s32.totalorder %s10, 0
    %p77 = por %p75, %p76
    %p78 = scmp.ne.s32.totalorder %s70, %s72
    %p79 = scmp.eq.s32.totalorder %s15, 1
    %p80 = por %p78, %p79
    %p81 = scmp.ne.s32.totalorder %s72, %s73
    %p82 = scmp.eq.s32.totalorder %s15, 0
    %p83 = por %p81, %p82
    %p84 = scmp.ne.s32.totalorder %s72, %s73
    %p85 = scmp.eq.s32.totalorder %s16, 1
    %p86 = por %p84, %p85
    %p88 = scmp.ne.s32.totalorder %s73, %s87
    %p89 = scmp.eq.s32.totalorder %s16, 0
    %p90 = por %p88, %p89
    %s92 = sadd.s32 %s91, 1
    %p95 = scmp.eq.s32.totalorder %s10, 1
    %p96 = scmp.ne.s32.totalorder %s91, %s93
    %p97 = scmp.eq.s32.totalorder %s10, 0
    %p98 = por %p96, %p97
    %p99 = scmp.ne.s32.totalorder %s91, %s93
    %p100 = scmp.eq.s32.totalorder %s15, 1
    %p101 = por %p99, %p100
    %p102 = scmp.ne.s32.totalorder %s93, %s94
    %p103 = scmp.eq.s32.totalorder %s15, 0
    %p104 = por %p102, %p103
    %p105 = scmp.ne.s32.totalorder %s93, %s94
    %p106 = scmp.eq.s32.totalorder %s16, 1
    %p107 = por %p105, %p106
    %p109 = scmp.ne.s32.totalorder %s94, %s108
    %p110 = scmp.eq.s32.totalorder %s16, 0
    %p111 = por %p109, %p110
    %s112 = ssub.s32 %s10, %s17
    %p113 = scmp.eq.s32.totalorder %s112, 0
    %s115 = sadd.s32 %s114, 1
    %s116 = scalar_select %p113, %s114, %s115
    %p119 = pneg %p113
    %p120 = scmp.eq.s32.totalorder %s10, 1
    %p121 = por %p119, %p120
    %p122 = scmp.ne.s32.totalorder %s114, %s117
    %p123 = scmp.eq.s32.totalorder %s10, 0
    %p124 = por %p122, %p123
    %p125 = scmp.ne.s32.totalorder %s114, %s117
    %p126 = scmp.eq.s32.totalorder %s15, 1
    %p127 = por %p125, %p126
    %p128 = scmp.ne.s32.totalorder %s117, %s118
    %p129 = scmp.eq.s32.totalorder %s15, 0
    %p130 = por %p128, %p129
    %p131 = scmp.ne.s32.totalorder %s117, %s118
    %p132 = scmp.eq.s32.totalorder %s16, 1
    %p133 = por %p131, %p132
    %p135 = scmp.ne.s32.totalorder %s118, %s134
    %p136 = scmp.eq.s32.totalorder %s16, 0
    %p137 = por %p135, %p136
    %p138 = scmp.le.s32.totalorder 1, %s10
    %p139 = scmp.lt.s32.totalorder %s10, 3
    %p140 = pnand %p138, %p139
    %p141 = pneg %p140
    // Predicated region
    $region9: #{cayley_snl_forward.3} parent=5 // pred_check
      _
    $region10: #{cayley_snl_forward.3} parent=5 // pred_check_branch
      %143 = sbr.rel (%p140) target = $region12
    $region11: #{cayley_snl_forward.3} parent=5 // pred_region
      %s144 = ssub.s32 %s10, 1
      // Predicated region
      $region13: #{cayley_snl_forward.3} parent=11 // pred_check
        %p145 = pneg %p83
      $region14: #{cayley_snl_forward.3} parent=11 // pred_check_branch
        %147 = sbr.rel (%p145) target = $region16
      $region15: #{cayley_snl_forward.3} parent=11 // pred_region
        _
      $region16: #{cayley_snl_forward.3} parent=11 // pred_fallthru
        _
      // Predicated region
      $region17: #{cayley_snl_forward.3} parent=11 // pred_check
        %p148 = pneg %p104
      $region18: #{cayley_snl_forward.3} parent=11 // pred_check_branch
        %150 = sbr.rel (%p148) target = $region20
      $region19: #{cayley_snl_forward.3} parent=11 // pred_region
        _
      $region20: #{cayley_snl_forward.3} parent=11 // pred_fallthru
        _
    $region12: #{cayley_snl_forward.3} parent=5 // pred_fallthru
      _
    %p151 = scmp.lt.s32.totalorder %s10, 2
    // Predicated region
    $region21: #{cayley_snl_forward.3} parent=5 // pred_check
      %p152 = pneg %p151
    $region22: #{cayley_snl_forward.3} parent=5 // pred_check_branch
      %154 = sbr.rel (%p152) target = $region24
    $region23: #{cayley_snl_forward.3} parent=5 // pred_region
      // Predicated region
      $region25: #{cayley_snl_forward.3} parent=23 // pred_check
        %p155 = pneg %p30
      $region26: #{cayley_snl_forward.3} parent=23 // pred_check_branch
        %157 = sbr.rel (%p155) target = $region28
      $region27: #{cayley_snl_forward.3} parent=23 // pred_region
        %p158 = scmp.lt.s32.totalorder %s10, 1
        %s159 = scalar_select %p158, %s10, 1
        %s160 = smul.addr %s159, 8
        %s161 = scalar_lea.vmem %s0, %s160
      $region28: #{cayley_snl_forward.3} parent=23 // pred_fallthru
        _
      // Predicated region
      $region29: #{cayley_snl_forward.3} parent=23 // pred_check
        %p162 = pneg %p56
      $region30: #{cayley_snl_forward.3} parent=23 // pred_check_branch
        %164 = sbr.rel (%p162) target = $region32
      $region31: #{cayley_snl_forward.3} parent=23 // pred_region
        %p165 = scmp.lt.s32.totalorder %s10, 1
        %s166 = scalar_select %p165, %s10, 1
        %s167 = smul.addr %s166, 8
        %s168 = scalar_lea.vmem %s1, %s167
      $region32: #{cayley_snl_forward.3} parent=23 // pred_fallthru
        _
    $region24: #{cayley_snl_forward.3} parent=5 // pred_fallthru
      _
    %p169 = scmp.le.s32.totalorder 1, %s10
    %p170 = scmp.lt.s32.totalorder %s10, 3
    %p171 = pnand %p169, %p170
    %p172 = pneg %p171
    // Predicated region
    $region33: #{cayley_snl_forward.3} parent=5 // pred_check
      _
    $region34: #{cayley_snl_forward.3} parent=5 // pred_check_branch
      %174 = sbr.rel (%p171) target = $region36
    $region35: #{cayley_snl_forward.3} parent=5 // pred_region
      %s175 = ssub.s32 %s10, 1
      %p176 = scmp.lt.s32.totalorder %s15, 1
      %s177 = scalar_select %p176, %s15, 1
      %s178 = smul.addr %s177, 8
      %s179 = scalar_lea.vmem %s0, %s178
      %p180 = pneg %p36
      %p181 = pneg %p33
      %p182 = scmp.lt.s32.totalorder %s15, 1
      %s183 = scalar_select %p182, %s15, 1
      %s184 = smul.addr %s183, 8
      %s185 = scalar_lea.vmem %s1, %s184
      %p186 = pneg %p62
      %p187 = pneg %p59
      %p188 = pneg %p83
      %p189 = pneg %p80
      %p190 = pneg %p104
      %p191 = pneg %p101
      %p192 = pneg %p130
      %p193 = pneg %p127
      %p194 = scmp.lt.s32.totalorder %s15, 1
      %s195 = scalar_select %p194, %s15, 1
      %s196 = smul.addr %s195, 8
      %s197 = scalar_lea.vmem %s4, %s196
      %p198 = scmp.lt.s32.totalorder %s15, 1
      %s199 = scalar_select %p198, %s15, 1
      %s200 = smul.addr %s199, 8
      %s201 = scalar_lea.vmem %s0, %s200
      %p202 = scmp.lt.s32.totalorder %s15, 1
      %s203 = scalar_select %p202, %s15, 1
      %s204 = smul.addr %s203, 8
      %s205 = scalar_lea.vmem %s1, %s204
      %p206 = scmp.lt.s32.totalorder %s15, 1
      %s207 = scalar_select %p206, %s15, 1
      %s208 = smul.addr %s207, 8
      %s209 = scalar_lea.vmem %s4, %s208
      %v210 = vld [vmem:[%s2] sm:$0xff]
      %v211 = vld [vmem:[%s3] sm:$0xff]
      %v212 = vld [vmem:[%s201] sm:$0xff]
      %214 = vset.pattern.permute.xlu0 0
      %215 = vperm.xlu0 %214, %v210
      %v216 = vpop.permute.xlu0 %215
      %v218 = vmul.f32 %v212, %v216
      %220 = vset.pattern.permute.xlu0 0
      %221 = vperm.xlu0 %220, %v211
      %v222 = vpop.permute.xlu0 %221
      %v224 = vadd.f32 %v218, %v222
      %v225 = vmax.f32 %v224, 0.0
      %v226 = vld [vmem:[%s205] sm:$0xff]
      %v227 = vadd.f32 %v225, %v226
      %vm228 = vcmask 523264
      %229 = vst.msk [vmem:[%s209] sm:$0xff] %vm228, %v227
      %p230 = scmp.lt.s32.totalorder %s15, 1
      %s231 = scalar_select %p230, %s15, 1
      %s232 = smul.addr %s231, 8
      %s233 = scalar_lea.vmem %s4, %s232
      // Predicated region
      $region37: #{cayley_snl_forward.3} parent=35 // pred_check
        %p234 = pneg %p127
      $region38: #{cayley_snl_forward.3} parent=35 // pred_check_branch
        %236 = sbr.rel (%p234) target = $region40
      $region39: #{cayley_snl_forward.3} parent=35 // pred_region
        _
      $region40: #{cayley_snl_forward.3} parent=35 // pred_fallthru
        _
    $region36: #{cayley_snl_forward.3} parent=5 // pred_fallthru
      _
    %p237 = scmp.le.s32.totalorder 2, %s10
    // Predicated region
    $region41: #{cayley_snl_forward.3} parent=5 // pred_check
      %p238 = pneg %p237
    $region42: #{cayley_snl_forward.3} parent=5 // pred_check_branch
      %240 = sbr.rel (%p238) target = $region44
    $region43: #{cayley_snl_forward.3} parent=5 // pred_region
      %s241 = ssub.s32 %s10, 2
      // Predicated region
      $region45: #{cayley_snl_forward.3} parent=43 // pred_check
        %p242 = pneg %p133
      $region46: #{cayley_snl_forward.3} parent=43 // pred_check_branch
        %244 = sbr.rel (%p242) target = $region48
      $region47: #{cayley_snl_forward.3} parent=43 // pred_region
        %p245 = scmp.lt.s32.totalorder %s16, 1
        %s246 = scalar_select %p245, %s16, 1
        %s247 = smul.addr %s246, 8
        %s248 = scalar_lea.vmem %s4, %s247
      $region48: #{cayley_snl_forward.3} parent=43 // pred_fallthru
        _
    $region44: #{cayley_snl_forward.3} parent=5 // pred_fallthru
      _
  $region6: #{cayley_snl_forward.3} parent=0 // loop_footer
    %s14 = sadd.s32 1, %s10
  $region7: #{cayley_snl_forward.3} parent=0 // loop_footer_branch
    %9 = sbr.rel target = $region3
  $region8: #{cayley_snl_forward.3} parent=0 // loop_exit
    _

// kernel: cayley_snl_forward.2
$region0: #{cayley_snl_forward.2}
  #allocation0 [shape = 'u32[]', space=smem, size = 0x4, offset = 0x4, fixed_abs, tag = 'smem constant byte address 0x4 - core index']
  #allocation1 [shape = 'u32[144,128]{1,0:T(1,128)}', space=vmem, size = 0x12000, scoped, tag = 'internal scratch']
  %s0 = inlined_call_operand.vmem [shape: f32[2,8,64], index: 0, kind: input, shape index: {}]
  %s1 = inlined_call_operand.vmem [shape: f32[2,64,64], index: 1, kind: input, shape index: {}]
  %s2 = inlined_call_operand.vmem [shape: f32[16,8], index: 2, kind: input, shape index: {}]
  %s3 = inlined_call_operand.vmem [shape: f32[8,16], index: 3, kind: input, shape index: {}]
  %s4 = inlined_call_operand.vmem [shape: f32[8,16], index: 4, kind: input, shape index: {}]
  %s5 = inlined_call_operand.vmem [shape: f32[2,8,64], index: 5, kind: output, shape index: {0}]
  %s6 = inlined_call_operand.vmem [shape: f32[2,8,1], index: 6, kind: output, shape index: {1}]
  %s7 = inlined_call_operand.vmem [shape: f32[2,8,1], index: 7, kind: output, shape index: {2}]
  %8 = xla_tuple %s5, %s6, %s7
  %s9 = sld [smem:[#allocation0]]
  $region69: #{cayley_snl_forward.2} parent=0
    _
  %s11 = ssub.s32 1, %s9
  %s12 = scalar_select 0, %s11, %s9
  loop: start=0, step=1, limit=4
  $region2: #{cayley_snl_forward.2} parent=0 // loop_pre_header
    _
  $region3: #{cayley_snl_forward.2} parent=0 // loop_header
    %s14 = sphi 0, %s18
    %p15 = scmp.ge.s32.totalorder %s14, 4
    %s24 = sphi 0, %s26
    %s27 = sphi 0, %s24
    %s28 = sphi 0, %s27
    %s44 = sphi 0, %s28
    %s50 = sphi 0, %s52
    %s53 = sphi 0, %s50
    %s54 = sphi 0, %s53
    %s70 = sphi 0, %s54
    %s74 = sphi 0, %s74
    %s76 = sphi 0, %s74
    %s77 = sphi 0, %s76
    %s91 = sphi 0, %s77
    %s95 = sphi 0, %s95
    %s97 = sphi 0, %s95
    %s98 = sphi 0, %s97
    %s112 = sphi 0, %s98
    %s116 = sphi 0, %s116
    %s118 = sphi 0, %s116
    %s119 = sphi 0, %s118
    %s133 = sphi 0, %s119
    %s139 = sphi 0, %s141
    %s142 = sphi 0, %s139
    %s143 = sphi 0, %s142
    %s159 = sphi 0, %s143
    %s165 = sphi 0, %s167
    %s168 = sphi 0, %s165
    %s169 = sphi 0, %s168
    %s185 = sphi 0, %s169
    %s191 = sphi 0, %s193
    %s194 = sphi 0, %s191
    %s195 = sphi 0, %s194
    %s211 = sphi 0, %s195
  $region4: #{cayley_snl_forward.2} parent=0 // loop_header_branch
    %17 = sbr.rel (%p15) target = $region8
  $region5: #{cayley_snl_forward.2} parent=0 // loop_body
    %s19 = ssub.s32 %s14, 1
    %s20 = ssub.s32 %s14, 2
    %s21 = sadd.s32 %s14, 1
    %s22 = ssub.s32 %s14, %s21
    %p23 = scmp.eq.s32.totalorder %s22, 0
    %s25 = sadd.s32 %s24, 1
    %s26 = scalar_select %p23, %s24, %s25
    %p29 = pneg %p23
    %p30 = scmp.eq.s32.totalorder %s14, 1
    %p31 = por %p29, %p30
    %p32 = scmp.ne.s32.totalorder %s24, %s27
    %p33 = scmp.eq.s32.totalorder %s14, 0
    %p34 = por %p32, %p33
    %p35 = scmp.ne.s32.totalorder %s24, %s27
    %p36 = scmp.eq.s32.totalorder %s19, 1
    %p37 = por %p35, %p36
    %p38 = scmp.ne.s32.totalorder %s27, %s28
    %p39 = scmp.eq.s32.totalorder %s19, 0
    %p40 = por %p38, %p39
    %p41 = scmp.ne.s32.totalorder %s27, %s28
    %p42 = scmp.eq.s32.totalorder %s20, 1
    %p43 = por %p41, %p42
    %p45 = scmp.ne.s32.totalorder %s28, %s44
    %p46 = scmp.eq.s32.totalorder %s20, 0
    %p47 = por %p45, %p46
    %s48 = ssub.s32 %s14, %s21
    %p49 = scmp.eq.s32.totalorder %s48, 0
    %s51 = sadd.s32 %s50, 1
    %s52 = scalar_select %p49, %s50, %s51
    %p55 = pneg %p49
    %p56 = scmp.eq.s32.totalorder %s14, 1
    %p57 = por %p55, %p56
    %p58 = scmp.ne.s32.totalorder %s50, %s53
    %p59 = scmp.eq.s32.totalorder %s14, 0
    %p60 = por %p58, %p59
    %p61 = scmp.ne.s32.totalorder %s50, %s53
    %p62 = scmp.eq.s32.totalorder %s19, 1
    %p63 = por %p61, %p62
    %p64 = scmp.ne.s32.totalorder %s53, %s54
    %p65 = scmp.eq.s32.totalorder %s19, 0
    %p66 = por %p64, %p65
    %p67 = scmp.ne.s32.totalorder %s53, %s54
    %p68 = scmp.eq.s32.totalorder %s20, 1
    %p69 = por %p67, %p68
    %p71 = scmp.ne.s32.totalorder %s54, %s70
    %p72 = scmp.eq.s32.totalorder %s20, 0
    %p73 = por %p71, %p72
    %s75 = sadd.s32 %s74, 1
    %p78 = scmp.eq.s32.totalorder %s14, 1
    %p79 = scmp.ne.s32.totalorder %s74, %s76
    %p80 = scmp.eq.s32.totalorder %s14, 0
    %p81 = por %p79, %p80
    %p82 = scmp.ne.s32.totalorder %s74, %s76
    %p83 = scmp.eq.s32.totalorder %s19, 1
    %p84 = por %p82, %p83
    %p85 = scmp.ne.s32.totalorder %s76, %s77
    %p86 = scmp.eq.s32.totalorder %s19, 0
    %p87 = por %p85, %p86
    %p88 = scmp.ne.s32.totalorder %s76, %s77
    %p89 = scmp.eq.s32.totalorder %s20, 1
    %p90 = por %p88, %p89
    %p92 = scmp.ne.s32.totalorder %s77, %s91
    %p93 = scmp.eq.s32.totalorder %s20, 0
    %p94 = por %p92, %p93
    %s96 = sadd.s32 %s95, 1
    %p99 = scmp.eq.s32.totalorder %s14, 1
    %p100 = scmp.ne.s32.totalorder %s95, %s97
    %p101 = scmp.eq.s32.totalorder %s14, 0
    %p102 = por %p100, %p101
    %p103 = scmp.ne.s32.totalorder %s95, %s97
    %p104 = scmp.eq.s32.totalorder %s19, 1
    %p105 = por %p103, %p104
    %p106 = scmp.ne.s32.totalorder %s97, %s98
    %p107 = scmp.eq.s32.totalorder %s19, 0
    %p108 = por %p106, %p107
    %p109 = scmp.ne.s32.totalorder %s97, %s98
    %p110 = scmp.eq.s32.totalorder %s20, 1
    %p111 = por %p109, %p110
    %p113 = scmp.ne.s32.totalorder %s98, %s112
    %p114 = scmp.eq.s32.totalorder %s20, 0
    %p115 = por %p113, %p114
    %s117 = sadd.s32 %s116, 1
    %p120 = scmp.eq.s32.totalorder %s14, 1
    %p121 = scmp.ne.s32.totalorder %s116, %s118
    %p122 = scmp.eq.s32.totalorder %s14, 0
    %p123 = por %p121, %p122
    %p124 = scmp.ne.s32.totalorder %s116, %s118
    %p125 = scmp.eq.s32.totalorder %s19, 1
    %p126 = por %p124, %p125
    %p127 = scmp.ne.s32.totalorder %s118, %s119
    %p128 = scmp.eq.s32.totalorder %s19, 0
    %p129 = por %p127, %p128
    %p130 = scmp.ne.s32.totalorder %s118, %s119
    %p131 = scmp.eq.s32.totalorder %s20, 1
    %p132 = por %p130, %p131
    %p134 = scmp.ne.s32.totalorder %s119, %s133
    %p135 = scmp.eq.s32.totalorder %s20, 0
    %p136 = por %p134, %p135
    %s137 = ssub.s32 %s14, %s21
    %p138 = scmp.eq.s32.totalorder %s137, 0
    %s140 = sadd.s32 %s139, 1
    %s141 = scalar_select %p138, %s139, %s140
    %p144 = pneg %p138
    %p145 = scmp.eq.s32.totalorder %s14, 1
    %p146 = por %p144, %p145
    %p147 = scmp.ne.s32.totalorder %s139, %s142
    %p148 = scmp.eq.s32.totalorder %s14, 0
    %p149 = por %p147, %p148
    %p150 = scmp.ne.s32.totalorder %s139, %s142
    %p151 = scmp.eq.s32.totalorder %s19, 1
    %p152 = por %p150, %p151
    %p153 = scmp.ne.s32.totalorder %s142, %s143
    %p154 = scmp.eq.s32.totalorder %s19, 0
    %p155 = por %p153, %p154
    %p156 = scmp.ne.s32.totalorder %s142, %s143
    %p157 = scmp.eq.s32.totalorder %s20, 1
    %p158 = por %p156, %p157
    %p160 = scmp.ne.s32.totalorder %s143, %s159
    %p161 = scmp.eq.s32.totalorder %s20, 0
    %p162 = por %p160, %p161
    %s163 = ssub.s32 %s14, %s21
    %p164 = scmp.eq.s32.totalorder %s163, 0
    %s166 = sadd.s32 %s165, 1
    %s167 = scalar_select %p164, %s165, %s166
    %p170 = pneg %p164
    %p171 = scmp.eq.s32.totalorder %s14, 1
    %p172 = por %p170, %p171
    %p173 = scmp.ne.s32.totalorder %s165, %s168
    %p174 = scmp.eq.s32.totalorder %s14, 0
    %p175 = por %p173, %p174
    %p176 = scmp.ne.s32.totalorder %s165, %s168
    %p177 = scmp.eq.s32.totalorder %s19, 1
    %p178 = por %p176, %p177
    %p179 = scmp.ne.s32.totalorder %s168, %s169
    %p180 = scmp.eq.s32.totalorder %s19, 0
    %p181 = por %p179, %p180
    %p182 = scmp.ne.s32.totalorder %s168, %s169
    %p183 = scmp.eq.s32.totalorder %s20, 1
    %p184 = por %p182, %p183
    %p186 = scmp.ne.s32.totalorder %s169, %s185
    %p187 = scmp.eq.s32.totalorder %s20, 0
    %p188 = por %p186, %p187
    %s189 = ssub.s32 %s14, %s21
    %p190 = scmp.eq.s32.totalorder %s189, 0
    %s192 = sadd.s32 %s191, 1
    %s193 = scalar_select %p190, %s191, %s192
    %p196 = pneg %p190
    %p197 = scmp.eq.s32.totalorder %s14, 1
    %p198 = por %p196, %p197
    %p199 = scmp.ne.s32.totalorder %s191, %s194
    %p200 = scmp.eq.s32.totalorder %s14, 0
    %p201 = por %p199, %p200
    %p202 = scmp.ne.s32.totalorder %s191, %s194
    %p203 = scmp.eq.s32.totalorder %s19, 1
    %p204 = por %p202, %p203
    %p205 = scmp.ne.s32.totalorder %s194, %s195
    %p206 = scmp.eq.s32.totalorder %s19, 0
    %p207 = por %p205, %p206
    %p208 = scmp.ne.s32.totalorder %s194, %s195
    %p209 = scmp.eq.s32.totalorder %s20, 1
    %p210 = por %p208, %p209
    %p212 = scmp.ne.s32.totalorder %s195, %s211
    %p213 = scmp.eq.s32.totalorder %s20, 0
    %p214 = por %p212, %p213
    %p215 = scmp.le.s32.totalorder 1, %s14
    %p216 = scmp.lt.s32.totalorder %s14, 3
    %p217 = pnand %p215, %p216
    %p218 = pneg %p217
    // Predicated region
    $region9: #{cayley_snl_forward.2} parent=5 // pred_check
      _
    $region10: #{cayley_snl_forward.2} parent=5 // pred_check_branch
      %220 = sbr.rel (%p217) target = $region12
    $region11: #{cayley_snl_forward.2} parent=5 // pred_region
      %s221 = ssub.s32 %s14, 1
      // Predicated region
      $region13: #{cayley_snl_forward.2} parent=11 // pred_check
        %p222 = pneg %p87
      $region14: #{cayley_snl_forward.2} parent=11 // pred_check_branch
        %224 = sbr.rel (%p222) target = $region16
      $region15: #{cayley_snl_forward.2} parent=11 // pred_region
        _
      $region16: #{cayley_snl_forward.2} parent=11 // pred_fallthru
        _
      // Predicated region
      $region17: #{cayley_snl_forward.2} parent=11 // pred_check
        %p225 = pneg %p108
      $region18: #{cayley_snl_forward.2} parent=11 // pred_check_branch
        %227 = sbr.rel (%p225) target = $region20
      $region19: #{cayley_snl_forward.2} parent=11 // pred_region
        _
      $region20: #{cayley_snl_forward.2} parent=11 // pred_fallthru
        _
      // Predicated region
      $region21: #{cayley_snl_forward.2} parent=11 // pred_check
        %p228 = pneg %p129
      $region22: #{cayley_snl_forward.2} parent=11 // pred_check_branch
        %230 = sbr.rel (%p228) target = $region24
      $region23: #{cayley_snl_forward.2} parent=11 // pred_region
        _
      $region24: #{cayley_snl_forward.2} parent=11 // pred_fallthru
        _
    $region12: #{cayley_snl_forward.2} parent=5 // pred_fallthru
      _
    %p231 = scmp.lt.s32.totalorder %s14, 2
    // Predicated region
    $region25: #{cayley_snl_forward.2} parent=5 // pred_check
      %p232 = pneg %p231
    $region26: #{cayley_snl_forward.2} parent=5 // pred_check_branch
      %234 = sbr.rel (%p232) target = $region28
    $region27: #{cayley_snl_forward.2} parent=5 // pred_region
      // Predicated region
      $region29: #{cayley_snl_forward.2} parent=27 // pred_check
        %p235 = pneg %p34
      $region30: #{cayley_snl_forward.2} parent=27 // pred_check_branch
        %237 = sbr.rel (%p235) target = $region32
      $region31: #{cayley_snl_forward.2} parent=27 // pred_region
        %p238 = scmp.lt.s32.totalorder %s14, 1
        %s239 = scalar_select %p238, %s14, 1
        %s240 = smul.addr %s239, 8
        %s241 = scalar_lea.vmem %s0, %s240
      $region32: #{cayley_snl_forward.2} parent=27 // pred_fallthru
        _
      // Predicated region
      $region33: #{cayley_snl_forward.2} parent=27 // pred_check
        %p242 = pneg %p60
      $region34: #{cayley_snl_forward.2} parent=27 // pred_check_branch
        %244 = sbr.rel (%p242) target = $region36
      $region35: #{cayley_snl_forward.2} parent=27 // pred_region
        %p245 = scmp.lt.s32.totalorder %s14, 1
        %s246 = scalar_select %p245, %s14, 1
        %s247 = smul.addr %s246, 8
        %s248 = smul.addr %s247, 8
        %s249 = scalar_lea.vmem %s1, %s248
      $region36: #{cayley_snl_forward.2} parent=27 // pred_fallthru
        _
    $region28: #{cayley_snl_forward.2} parent=5 // pred_fallthru
      _
    %p250 = scmp.le.s32.totalorder 1, %s14
    %p251 = scmp.lt.s32.totalorder %s14, 3
    %p252 = pnand %p250, %p251
    %p253 = pneg %p252
    // Predicated region
    $region37: #{cayley_snl_forward.2} parent=5 // pred_check
      _
    $region38: #{cayley_snl_forward.2} parent=5 // pred_check_branch
      %255 = sbr.rel (%p252) target = $region40
    $region39: #{cayley_snl_forward.2} parent=5 // pred_region
      %s256 = ssub.s32 %s14, 1
      %p257 = scmp.lt.s32.totalorder %s19, 1
      %s258 = scalar_select %p257, %s19, 1
      %s259 = smul.addr %s258, 8
      %s260 = scalar_lea.vmem %s0, %s259
      %p261 = pneg %p40
      %p262 = pneg %p37
      %p263 = scmp.lt.s32.totalorder %s19, 1
      %s264 = scalar_select %p263, %s19, 1
      %s265 = smul.addr %s264, 8
      %s266 = smul.addr %s265, 8
      %s267 = scalar_lea.vmem %s1, %s266
      %p268 = pneg %p66
      %p269 = pneg %p63
      %p270 = pneg %p87
      %p271 = pneg %p84
      %p272 = pneg %p108
      %p273 = pneg %p105
      %p274 = pneg %p129
      %p275 = pneg %p126
      %p276 = pneg %p155
      %p277 = pneg %p152
      %p278 = scmp.lt.s32.totalorder %s19, 1
      %s279 = scalar_select %p278, %s19, 1
      %s280 = smul.addr %s279, 8
      %s281 = scalar_lea.vmem %s5, %s280
      %p282 = pneg %p181
      %p283 = pneg %p178
      %p284 = scmp.lt.s32.totalorder %s19, 1
      %s285 = scalar_select %p284, %s19, 1
      %s286 = smul.addr %s285, 8
      %s287 = scalar_lea.vmem %s6, %s286
      %p288 = pneg %p207
      %p289 = pneg %p204
      %p290 = scmp.lt.s32.totalorder %s19, 1
      %s291 = scalar_select %p290, %s19, 1
      %s292 = smul.addr %s291, 8
      %s293 = scalar_lea.vmem %s7, %s292
      %p294 = scmp.lt.s32.totalorder %s19, 1
      %s295 = scalar_select %p294, %s19, 1
      %s296 = smul.addr %s295, 8
      %s297 = scalar_lea.vmem %s0, %s296
      %p298 = scmp.lt.s32.totalorder %s19, 1
      %s299 = scalar_select %p298, %s19, 1
      %s300 = smul.addr %s299, 8
      %s301 = smul.addr %s300, 8
      %s302 = scalar_lea.vmem %s1, %s301
      %p303 = scmp.lt.s32.totalorder %s19, 1
      %s304 = scalar_select %p303, %s19, 1
      %s305 = smul.addr %s304, 8
      %s306 = scalar_lea.vmem %s5, %s305
      %p307 = scmp.lt.s32.totalorder %s19, 1
      %s308 = scalar_select %p307, %s19, 1
      %s309 = smul.addr %s308, 8
      %s310 = scalar_lea.vmem %s6, %s309
      %p311 = scmp.lt.s32.totalorder %s19, 1
      %s312 = scalar_select %p311, %s19, 1
      %s313 = smul.addr %s312, 8
      %s314 = scalar_lea.vmem %s7, %s313
      %v315 = vld [vmem:[%s2] sm:$0xff]
      %v316 = vld [vmem:[%s2 + $0x8] sm:$0xff]
      %v317 = vld [vmem:[%s3] sm:$0xff]
      %v318 = vld [vmem:[%s4] sm:$0xff]
      %v319 = vld [vmem:[%s297] sm:$0xff]
      %v320 = vld [vmem:[%s302] sm:$0xff]
      %v321 = vld [vmem:[%s302 + $0x8] sm:$0xff]
      %v322 = vld [vmem:[%s302 + $0x10] sm:$0xff]
      %v323 = vld [vmem:[%s302 + $0x18] sm:$0xff]
      %v324 = vld [vmem:[%s302 + $0x20] sm:$0xff]
      %v325 = vld [vmem:[%s302 + $0x28] sm:$0xff]
      %v326 = vld [vmem:[%s302 + $0x30] sm:$0xff]
      %v327 = vld [vmem:[%s302 + $0x38] sm:$0xff]
      %vm328 = vcmask 64512
      %v330 = vsel %vm328, %v315, 0
      %v333 = vsel %vm328, %v316, 0
      %335 = vmatprep.subr.mxu0 0.0
      %336 = vmatpush1.msra.mxu0 %v319
      %337 = vmatprep.subr.mxu0 0.0
      %338 = vmatpush1.msra.mxu0 0.0
      %339 = vmatprep.subr.mxu0 0.0
      %340 = vmatpush1.msra.mxu0 0.0
      %341 = vmatprep.subr.mxu0 0.0
      %342 = vmatpush1.msra.mxu0 0.0
      %343 = vmatprep.subr.mxu0 0.0
      %344 = vmatpush1.msra.mxu0 0.0
      %345 = vmatprep.subr.mxu0 0.0
      %346 = vmatpush1.msra.mxu0 0.0
      %347 = vmatprep.subr.mxu0 0.0
      %348 = vmatpush1.msra.mxu0 0.0
      %349 = vmatprep.subr.mxu0 0.0
      %350 = vmatpush1.msra.mxu0 0.0
      %351 = vmatprep.subr.mxu0 0.0
      %352 = vmatpush1.msra.mxu0 0.0
      %353 = vmatprep.subr.mxu0 0.0
      %354 = vmatpush1.msra.mxu0 0.0
      %355 = vmatprep.subr.mxu0 0.0
      %356 = vmatpush1.msra.mxu0 0.0
      %357 = vmatprep.subr.mxu0 0.0
      %358 = vmatpush1.msra.mxu0 0.0
      %359 = vmatprep.subr.mxu0 0.0
      %360 = vmatpush1.msra.mxu0 0.0
      %361 = vmatprep.subr.mxu0 0.0
      %362 = vmatpush1.msra.mxu0 0.0
      %363 = vmatprep.subr.mxu0 0.0
      %364 = vmatpush1.msra.mxu0 0.0
      %365 = vmatprep.subr.mxu0 0.0
      %366 = vmatpush1.msra.mxu0 0.0
      %367 = vmatprep.subr.mxu0 0.0
      %368 = vmatpush1.msra.mxu0 0.0
      %369 = vmatprep.subr.mxu0 0.0
      %370 = vmatpush1.msra.mxu0 0.0
      %371 = vmatprep.subr.mxu0 0.0
      %372 = vmatpush1.msra.mxu0 0.0
      %373 = vmatprep.subr.mxu0 0.0
      %374 = vmatpush1.msra.mxu0 0.0
      %375 = vmatprep.subr.mxu0 0.0
      %376 = vmatpush1.msra.mxu0 0.0
      %377 = vmatprep.subr.mxu0 0.0
      %378 = vmatpush1.msra.mxu0 0.0
      %379 = vmatprep.subr.mxu0 0.0
      %380 = vmatpush1.msra.mxu0 0.0
      %381 = vmatprep.subr.mxu0 0.0
      %382 = vmatpush1.msra.mxu0 0.0
      %383 = vmatprep.subr.mxu0 0.0
      %384 = vmatpush1.msra.mxu0 0.0
      %385 = vmatprep.subr.mxu0 0.0
      %386 = vmatpush1.msra.mxu0 0.0
      %387 = vmatprep.subr.mxu0 0.0
      %388 = vmatpush1.msra.mxu0 0.0
      %389 = vmatprep.subr.mxu0 0.0
      %390 = vmatpush1.msra.mxu0 0.0
      %391 = vmatprep.subr.mxu0 0.0
      %392 = vmatpush1.msra.mxu0 0.0
      %393 = vmatprep.subr.mxu0 0.0
      %394 = vmatpush1.msra.mxu0 0.0
      %395 = vmatprep.subr.mxu0 0.0
      %396 = vmatpush1.msra.mxu0 0.0
      %397 = vmatprep.subr.mxu0 0.0
      %398 = vmatpush1.msra.mxu0 0.0
      %399 = vmatprep.mubr.f32.mxu0 0.0
      %400 = vmatmul.mubr.f32.gmra.mrb[0].mxu0 %v330
      %v401 = vpop.f32.mrb[0].mxu0
      %v402 = vadd.f32 0.0, %v401
      %v403 = vpop.f32.mrb[0].mxu0
      %404 = vmatprep.mubr.f32.mxu0 0.0
      %405 = vmatmul.mubr.f32.gmra.mrb[0].mxu0 %v333
      %v406 = vpop.f32.mrb[0].mxu0
      %v407 = vadd.f32 0.0, %v406
      %v408 = vpop.f32.mrb[0].mxu0
      %409 = vdwg.mxu0
      %vm410 = vcmask 523264
      %v412 = vsel %vm410, %v402, 0
      %v415 = vsel %vm410, %v407, 0
      %v418 = vsel %vm410, %v320, 0
      %v421 = vsel %vm410, %v321, 0
      %v424 = vsel %vm410, %v322, 0
      %v427 = vsel %vm410, %v323, 0
      %v430 = vsel %vm410, %v324, 0
      %v433 = vsel %vm410, %v325, 0
      %v436 = vsel %vm410, %v326, 0
      %v439 = vsel %vm410, %v327, 0
      %441 = vmatprep.subr.mxu0 0.0
      %442 = vmatpush1.xpose.msra.mxu0 %v418
      %443 = vmatprep.subr.mxu0 0.0
      %444 = vmatpush1.xpose.msra.mxu0 %v421
      %445 = vmatprep.subr.mxu0 0.0
      %446 = vmatpush1.xpose.msra.mxu0 %v424
      %447 = vmatprep.subr.mxu0 0.0
      %448 = vmatpush1.xpose.msra.mxu0 %v427
      %449 = vmatprep.subr.mxu0 0.0
      %450 = vmatpush1.xpose.msra.mxu0 %v430
      %451 = vmatprep.subr.mxu0 0.0
      %452 = vmatpush1.xpose.msra.mxu0 %v433
      %453 = vmatprep.subr.mxu0 0.0
      %454 = vmatpush1.xpose.msra.mxu0 %v436
      %455 = vmatprep.subr.mxu0 0.0
      %456 = vmatpush1.xpose.msra.mxu0 %v439
      %457 = vmatprep.subr.mxu0 0.0
      %458 = vmatpush1.xpose.msra.mxu0 0.0
      %459 = vmatprep.subr.mxu0 0.0
      %460 = vmatpush1.xpose.msra.mxu0 0.0
      %461 = vmatprep.subr.mxu0 0.0
      %462 = vmatpush1.xpose.msra.mxu0 0.0
      %463 = vmatprep.subr.mxu0 0.0
      %464 = vmatpush1.xpose.msra.mxu0 0.0
      %465 = vmatprep.subr.mxu0 0.0
      %466 = vmatpush1.xpose.msra.mxu0 0.0
      %467 = vmatprep.subr.mxu0 0.0
      %468 = vmatpush1.xpose.msra.mxu0 0.0
      %469 = vmatprep.subr.mxu0 0.0
      %470 = vmatpush1.xpose.msra.mxu0 0.0
      %471 = vmatprep.subr.mxu0 0.0
      %472 = vmatpush1.xpose.msra.mxu0 0.0
      %473 = vmatprep.subr.mxu0 0.0
      %474 = vmatpush1.xpose.msra.mxu0 0.0
      %475 = vmatprep.subr.mxu0 0.0
      %476 = vmatpush1.xpose.msra.mxu0 0.0
      %477 = vmatprep.subr.mxu0 0.0
      %478 = vmatpush1.xpose.msra.mxu0 0.0
      %479 = vmatprep.subr.mxu0 0.0
      %480 = vmatpush1.xpose.msra.mxu0 0.0
      %481 = vmatprep.subr.mxu0 0.0
      %482 = vmatpush1.xpose.msra.mxu0 0.0
      %483 = vmatprep.subr.mxu0 0.0
      %484 = vmatpush1.xpose.msra.mxu0 0.0
      %485 = vmatprep.subr.mxu0 0.0
      %486 = vmatpush1.xpose.msra.mxu0 0.0
      %487 = vmatprep.subr.mxu0 0.0
      %488 = vmatpush1.xpose.msra.mxu0 0.0
      %489 = vmatprep.subr.mxu0 0.0
      %490 = vmatpush1.xpose.msra.mxu0 0.0
      %491 = vmatprep.subr.mxu0 0.0
      %492 = vmatpush1.xpose.msra.mxu0 0.0
      %493 = vmatprep.subr.mxu0 0.0
      %494 = vmatpush1.xpose.msra.mxu0 0.0
      %495 = vmatprep.subr.mxu0 0.0
      %496 = vmatpush1.xpose.msra.mxu0 0.0
      %497 = vmatprep.subr.mxu0 0.0
      %498 = vmatpush1.xpose.msra.mxu0 0.0
      %499 = vmatprep.subr.mxu0 0.0
      %500 = vmatpush1.xpose.msra.mxu0 0.0
      %501 = vmatprep.subr.mxu0 0.0
      %502 = vmatpush1.xpose.msra.mxu0 0.0
      %503 = vmatprep.subr.mxu0 0.0
      %504 = vmatpush1.xpose.msra.mxu0 0.0
      %505 = vmatprep.mubr.f32.mxu0 0.0
      %506 = vmatmul.mubr.f32.gmra.mrb[0].mxu0 %v412
      %v507 = vpop.f32.mrb[0].mxu0
      %v508 = vadd.f32 0.0, %v507
      %v509 = vpop.f32.mrb[0].mxu0
      %510 = vmatprep.mubr.f32.mxu0 0.0
      %511 = vmatmul.mubr.f32.gmra.mrb[0].mxu0 %v415
      %v512 = vpop.f32.mrb[0].mxu0
      %v513 = vadd.f32 0.0, %v512
      %v514 = vpop.f32.mrb[0].mxu0
      %515 = vdwg.mxu0
      %v517 = vsel %vm410, %v508, 0
      %v520 = vsel %vm410, %v513, 0
      %522 = vmatprep.subr.mxu0 0.0
      %523 = vmatpush1.xpose.msra.mxu0 %v418
      %524 = vmatprep.subr.mxu0 0.0
      %525 = vmatpush1.xpose.msra.mxu0 %v421
      %526 = vmatprep.subr.mxu0 0.0
      %527 = vmatpush1.xpose.msra.mxu0 %v424
      %528 = vmatprep.subr.mxu0 0.0
      %529 = vmatpush1.xpose.msra.mxu0 %v427
      %530 = vmatprep.subr.mxu0 0.0
      %531 = vmatpush1.xpose.msra.mxu0 %v430
      %532 = vmatprep.subr.mxu0 0.0
      %533 = vmatpush1.xpose.msra.mxu0 %v433
      %534 = vmatprep.subr.mxu0 0.0
      %535 = vmatpush1.xpose.msra.mxu0 %v436
      %536 = vmatprep.subr.mxu0 0.0
      %537 = vmatpush1.xpose.msra.mxu0 %v439
      %538 = vmatprep.subr.mxu0 0.0
      %539 = vmatpush1.xpose.msra.mxu0 0.0
      %540 = vmatprep.subr.mxu0 0.0
      %541 = vmatpush1.xpose.msra.mxu0 0.0
      %542 = vmatprep.subr.mxu0 0.0
      %543 = vmatpush1.xpose.msra.mxu0 0.0
      %544 = vmatprep.subr.mxu0 0.0
      %545 = vmatpush1.xpose.msra.mxu0 0.0
      %546 = vmatprep.subr.mxu0 0.0
      %547 = vmatpush1.xpose.msra.mxu0 0.0
      %548 = vmatprep.subr.mxu0 0.0
      %549 = vmatpush1.xpose.msra.mxu0 0.0
      %550 = vmatprep.subr.mxu0 0.0
      %551 = vmatpush1.xpose.msra.mxu0 0.0
      %552 = vmatprep.subr.mxu0 0.0
      %553 = vmatpush1.xpose.msra.mxu0 0.0
      %554 = vmatprep.subr.mxu0 0.0
      %555 = vmatpush1.xpose.msra.mxu0 0.0
      %556 = vmatprep.subr.mxu0 0.0
      %557 = vmatpush1.xpose.msra.mxu0 0.0
      %558 = vmatprep.subr.mxu0 0.0
      %559 = vmatpush1.xpose.msra.mxu0 0.0
      %560 = vmatprep.subr.mxu0 0.0
      %561 = vmatpush1.xpose.msra.mxu0 0.0
      %562 = vmatprep.subr.mxu0 0.0
      %563 = vmatpush1.xpose.msra.mxu0 0.0
      %564 = vmatprep.subr.mxu0 0.0
      %565 = vmatpush1.xpose.msra.mxu0 0.0
      %566 = vmatprep.subr.mxu0 0.0
      %567 = vmatpush1.xpose.msra.mxu0 0.0
      %568 = vmatprep.subr.mxu0 0.0
      %569 = vmatpush1.xpose.msra.mxu0 0.0
      %570 = vmatprep.subr.mxu0 0.0
      %571 = vmatpush1.xpose.msra.mxu0 0.0
      %572 = vmatprep.subr.mxu0 0.0
      %573 = vmatpush1.xpose.msra.mxu0 0.0
      %574 = vmatprep.subr.mxu0 0.0
      %575 = vmatpush1.xpose.msra.mxu0 0.0
      %576 = vmatprep.subr.mxu0 0.0
      %577 = vmatpush1.xpose.msra.mxu0 0.0
      %578 = vmatprep.subr.mxu0 0.0
      %579 = vmatpush1.xpose.msra.mxu0 0.0
      %580 = vmatprep.subr.mxu0 0.0
      %581 = vmatpush1.xpose.msra.mxu0 0.0
      %582 = vmatprep.subr.mxu0 0.0
      %583 = vmatpush1.xpose.msra.mxu0 0.0
      %584 = vmatprep.subr.mxu0 0.0
      %585 = vmatpush1.xpose.msra.mxu0 0.0
      %586 = vmatprep.mubr.f32.mxu0 0.0
      %587 = vmatmul.mubr.f32.gmra.mrb[0].mxu0 %v517
      %v588 = vpop.f32.mrb[0].mxu0
      %v589 = vadd.f32 0.0, %v588
      %v590 = vpop.f32.mrb[0].mxu0
      %591 = vmatprep.mubr.f32.mxu0 0.0
      %592 = vmatmul.mubr.f32.gmra.mrb[0].mxu0 %v520
      %v593 = vpop.f32.mrb[0].mxu0
      %v594 = vadd.f32 0.0, %v593
      %v595 = vpop.f32.mrb[0].mxu0
      %596 = vdwg.mxu0
      %v597 = vmul.f32 %v508, 2.0
      %v598 = vmul.f32 %v513, 2.0
      %v599 = vsub.f32 %v402, %v597
      %v600 = vsub.f32 %v407, %v598
      %v601 = vadd.f32 %v599, %v589
      %v602 = vadd.f32 %v600, %v594
      %vm603 = vcmask 130048
      %v605 = vsel %vm603, %v318, 0
      %607 = vmatprep.subr.mxu0 0.0
      %608 = vmatpush1.msra.mxu0 %v601
      %609 = vmatprep.subr.mxu0 0.0
      %610 = vmatpush1.msra.mxu0 %v602
      %611 = vmatprep.subr.mxu0 0.0
      %612 = vmatpush1.msra.mxu0 0.0
      %613 = vmatprep.subr.mxu0 0.0
      %614 = vmatpush1.msra.mxu0 0.0
      %615 = vmatprep.subr.mxu0 0.0
      %616 = vmatpush1.msra.mxu0 0.0
      %617 = vmatprep.subr.mxu0 0.0
      %618 = vmatpush1.msra.mxu0 0.0
      %619 = vmatprep.subr.mxu0 0.0
      %620 = vmatpush1.msra.mxu0 0.0
      %621 = vmatprep.subr.mxu0 0.0
      %622 = vmatpush1.msra.mxu0 0.0
      %623 = vmatprep.subr.mxu0 0.0
      %624 = vmatpush1.msra.mxu0 0.0
      %625 = vmatprep.subr.mxu0 0.0
      %626 = vmatpush1.msra.mxu0 0.0
      %627 = vmatprep.subr.mxu0 0.0
      %628 = vmatpush1.msra.mxu0 0.0
      %629 = vmatprep.subr.mxu0 0.0
      %630 = vmatpush1.msra.mxu0 0.0
      %631 = vmatprep.subr.mxu0 0.0
      %632 = vmatpush1.msra.mxu0 0.0
      %633 = vmatprep.subr.mxu0 0.0
      %634 = vmatpush1.msra.mxu0 0.0
      %635 = vmatprep.subr.mxu0 0.0
      %636 = vmatpush1.msra.mxu0 0.0
      %637 = vmatprep.subr.mxu0 0.0
      %638 = vmatpush1.msra.mxu0 0.0
      %639 = vmatprep.subr.mxu0 0.0
      %640 = vmatpush1.msra.mxu0 0.0
      %641 = vmatprep.subr.mxu0 0.0
      %642 = vmatpush1.msra.mxu0 0.0
      %643 = vmatprep.subr.mxu0 0.0
      %644 = vmatpush1.msra.mxu0 0.0
      %645 = vmatprep.subr.mxu0 0.0
      %646 = vmatpush1.msra.mxu0 0.0
      %647 = vmatprep.subr.mxu0 0.0
      %648 = vmatpush1.msra.mxu0 0.0
      %649 = vmatprep.subr.mxu0 0.0
      %650 = vmatpush1.msra.mxu0 0.0
      %651 = vmatprep.subr.mxu0 0.0
      %652 = vmatpush1.msra.mxu0 0.0
      %653 = vmatprep.subr.mxu0 0.0
      %654 = vmatpush1.msra.mxu0 0.0
      %655 = vmatprep.subr.mxu0 0.0
      %656 = vmatpush1.msra.mxu0 0.0
      %657 = vmatprep.subr.mxu0 0.0
      %658 = vmatpush1.msra.mxu0 0.0
      %659 = vmatprep.subr.mxu0 0.0
      %660 = vmatpush1.msra.mxu0 0.0
      %661 = vmatprep.subr.mxu0 0.0
      %662 = vmatpush1.msra.mxu0 0.0
      %663 = vmatprep.subr.mxu0 0.0
      %664 = vmatpush1.msra.mxu0 0.0
      %665 = vmatprep.subr.mxu0 0.0
      %666 = vmatpush1.msra.mxu0 0.0
      %667 = vmatprep.subr.mxu0 0.0
      %668 = vmatpush1.msra.mxu0 0.0
      %669 = vmatprep.subr.mxu0 0.0
      %670 = vmatpush1.msra.mxu0 0.0
      %671 = vmatprep.mubr.f32.mxu0 0.0
      %672 = vmatmul.mubr.f32.gmra.mrb[0].mxu0 %v605
      %v673 = vpop.f32.mrb[0].mxu0
      %v674 = vadd.f32 0.0, %v673
      %v675 = vpop.f32.mrb[0].mxu0
      %676 = vdwg.mxu0
      %v678 = vsel %vm603, %v317, 0
      %680 = vmatprep.subr.mxu0 0.0
      %681 = vmatpush1.msra.mxu0 %v402
      %682 = vmatprep.subr.mxu0 0.0
      %683 = vmatpush1.msra.mxu0 %v407
      %684 = vmatprep.subr.mxu0 0.0
      %685 = vmatpush1.msra.mxu0 0.0
      %686 = vmatprep.subr.mxu0 0.0
      %687 = vmatpush1.msra.mxu0 0.0
      %688 = vmatprep.subr.mxu0 0.0
      %689 = vmatpush1.msra.mxu0 0.0
      %690 = vmatprep.subr.mxu0 0.0
      %691 = vmatpush1.msra.mxu0 0.0
      %692 = vmatprep.subr.mxu0 0.0
      %693 = vmatpush1.msra.mxu0 0.0
      %694 = vmatprep.subr.mxu0 0.0
      %695 = vmatpush1.msra.mxu0 0.0
      %696 = vmatprep.subr.mxu0 0.0
      %697 = vmatpush1.msra.mxu0 0.0
      %698 = vmatprep.subr.mxu0 0.0
      %699 = vmatpush1.msra.mxu0 0.0
      %700 = vmatprep.subr.mxu0 0.0
      %701 = vmatpush1.msra.mxu0 0.0
      %702 = vmatprep.subr.mxu0 0.0
      %703 = vmatpush1.msra.mxu0 0.0
      %704 = vmatprep.subr.mxu0 0.0
      %705 = vmatpush1.msra.mxu0 0.0
      %706 = vmatprep.subr.mxu0 0.0
      %707 = vmatpush1.msra.mxu0 0.0
      %708 = vmatprep.subr.mxu0 0.0
      %709 = vmatpush1.msra.mxu0 0.0
      %710 = vmatprep.subr.mxu0 0.0
      %711 = vmatpush1.msra.mxu0 0.0
      %712 = vmatprep.subr.mxu0 0.0
      %713 = vmatpush1.msra.mxu0 0.0
      %714 = vmatprep.subr.mxu0 0.0
      %715 = vmatpush1.msra.mxu0 0.0
      %716 = vmatprep.subr.mxu0 0.0
      %717 = vmatpush1.msra.mxu0 0.0
      %718 = vmatprep.subr.mxu0 0.0
      %719 = vmatpush1.msra.mxu0 0.0
      %720 = vmatprep.subr.mxu0 0.0
      %721 = vmatpush1.msra.mxu0 0.0
      %722 = vmatprep.subr.mxu0 0.0
      %723 = vmatpush1.msra.mxu0 0.0
      %724 = vmatprep.subr.mxu0 0.0
      %725 = vmatpush1.msra.mxu0 0.0
      %726 = vmatprep.subr.mxu0 0.0
      %727 = vmatpush1.msra.mxu0 0.0
      %728 = vmatprep.subr.mxu0 0.0
      %729 = vmatpush1.msra.mxu0 0.0
      %730 = vmatprep.subr.mxu0 0.0
      %731 = vmatpush1.msra.mxu0 0.0
      %732 = vmatprep.subr.mxu0 0.0
      %733 = vmatpush1.msra.mxu0 0.0
      %734 = vmatprep.subr.mxu0 0.0
      %735 = vmatpush1.msra.mxu0 0.0
      %736 = vmatprep.subr.mxu0 0.0
      %737 = vmatpush1.msra.mxu0 0.0
      %738 = vmatprep.subr.mxu0 0.0
      %739 = vmatpush1.msra.mxu0 0.0
      %740 = vmatprep.subr.mxu0 0.0
      %741 = vmatpush1.msra.mxu0 0.0
      %742 = vmatprep.subr.mxu0 0.0
      %743 = vmatpush1.msra.mxu0 0.0
      %744 = vmatprep.mubr.f32.mxu0 0.0
      %745 = vmatmul.mubr.f32.gmra.mrb[0].mxu0 %v678
      %v746 = vpop.f32.mrb[0].mxu0
      %v747 = vadd.f32 %v674, %v746
      %v748 = vpop.f32.mrb[0].mxu0
      %749 = vdwg.mxu0
      %750 = vst.msk [vmem:[%s306] sm:$0xff] %vm410, %v747
      %v751 = vsel %vm410, %v747, 0.0
      %752 = vadd.xlane.f32.xlu0 %v751
      %v753 = vpop.xlane.xlu0 %752
      %vm754 = vcmask 7168
      %755 = vst.msk [vmem:[%s310] sm:$0xff] %vm754, %v753
      %v756 = vmul.f32 %v747, %v747
      %v757 = vsel %vm410, %v756, 0.0
      %758 = vadd.xlane.f32.xlu0 %v757
      %v759 = vpop.xlane.xlu0 %758
      %760 = vst.msk [vmem:[%s314] sm:$0xff] %vm754, %v759
      %p761 = scmp.lt.s32.totalorder %s19, 1
      %s762 = scalar_select %p761, %s19, 1
      %s763 = smul.addr %s762, 8
      %s764 = scalar_lea.vmem %s5, %s763
      %p765 = scmp.lt.s32.totalorder %s19, 1
      %s766 = scalar_select %p765, %s19, 1
      %s767 = smul.addr %s766, 8
      %s768 = scalar_lea.vmem %s6, %s767
      %p769 = scmp.lt.s32.totalorder %s19, 1
      %s770 = scalar_select %p769, %s19, 1
      %s771 = smul.addr %s770, 8
      %s772 = scalar_lea.vmem %s7, %s771
      // Predicated region
      $region41: #{cayley_snl_forward.2} parent=39 // pred_check
        %p773 = pneg %p152
      $region42: #{cayley_snl_forward.2} parent=39 // pred_check_branch
        %775 = sbr.rel (%p773) target = $region44
      $region43: #{cayley_snl_forward.2} parent=39 // pred_region
        _
      $region44: #{cayley_snl_forward.2} parent=39 // pred_fallthru
        _
      // Predicated region
      $region45: #{cayley_snl_forward.2} parent=39 // pred_check
        %p776 = pneg %p178
      $region46: #{cayley_snl_forward.2} parent=39 // pred_check_branch
        %778 = sbr.rel (%p776) target = $region48
      $region47: #{cayley_snl_forward.2} parent=39 // pred_region
        _
      $region48: #{cayley_snl_forward.2} parent=39 // pred_fallthru
        _
      // Predicated region
      $region49: #{cayley_snl_forward.2} parent=39 // pred_check
        %p779 = pneg %p204
      $region50: #{cayley_snl_forward.2} parent=39 // pred_check_branch
        %781 = sbr.rel (%p779) target = $region52
      $region51: #{cayley_snl_forward.2} parent=39 // pred_region
        _
      $region52: #{cayley_snl_forward.2} parent=39 // pred_fallthru
        _
    $region40: #{cayley_snl_forward.2} parent=5 // pred_fallthru
      _
    %p782 = scmp.le.s32.totalorder 2, %s14
    // Predicated region
    $region53: #{cayley_snl_forward.2} parent=5 // pred_check
      %p783 = pneg %p782
    $region54: #{cayley_snl_forward.2} parent=5 // pred_check_branch
      %785 = sbr.rel (%p783) target = $region56
    $region55: #{cayley_snl_forward.2} parent=5 // pred_region
      %s786 = ssub.s32 %s14, 2
      // Predicated region
      $region57: #{cayley_snl_forward.2} parent=55 // pred_check
        %p787 = pneg %p158
      $region58: #{cayley_snl_forward.2} parent=55 // pred_check_branch
        %789 = sbr.rel (%p787) target = $region60
      $region59: #{cayley_snl_forward.2} parent=55 // pred_region
        %p790 = scmp.lt.s32.totalorder %s20, 1
        %s791 = scalar_select %p790, %s20, 1
        %s792 = smul.addr %s791, 8
        %s793 = scalar_lea.vmem %s5, %s792
      $region60: #{cayley_snl_forward.2} parent=55 // pred_fallthru
        _
      // Predicated region
      $region61: #{cayley_snl_forward.2} parent=55 // pred_check
        %p794 = pneg %p184
      $region62: #{cayley_snl_forward.2} parent=55 // pred_check_branch
        %796 = sbr.rel (%p794) target = $region64
      $region63: #{cayley_snl_forward.2} parent=55 // pred_region
        %p797 = scmp.lt.s32.totalorder %s20, 1
        %s798 = scalar_select %p797, %s20, 1
        %s799 = smul.addr %s798, 8
        %s800 = scalar_lea.vmem %s6, %s799
      $region64: #{cayley_snl_forward.2} parent=55 // pred_fallthru
        _
      // Predicated region
      $region65: #{cayley_snl_forward.2} parent=55 // pred_check
        %p801 = pneg %p210
      $region66: #{cayley_snl_forward.2} parent=55 // pred_check_branch
        %803 = sbr.rel (%p801) target = $region68
      $region67: #{cayley_snl_forward.2} parent=55 // pred_region
        %p804 = scmp.lt.s32.totalorder %s20, 1
        %s805 = scalar_select %p804, %s20, 1
        %s806 = smul.addr %s805, 8
        %s807 = scalar_lea.vmem %s7, %s806
      $region68: #{cayley_snl_forward.2} parent=55 // pred_fallthru
        _
    $region56: #{cayley_snl_forward.2} parent=5 // pred_fallthru
      _
  $region6: #{cayley_snl_forward.2} parent=0 // loop_footer
    %s18 = sadd.s32 1, %s14
  $region7: #{cayley_snl_forward.2} parent=0 // loop_footer_branch
    %13 = sbr.rel target = $region3
  $region8: #{cayley_snl_forward.2} parent=0 // loop_exit
    _

</llo_original>
